<compile_context>
chip_gen: v7x
topology: tpu7x:2x2x1
jax: 0.10.0
libtpu: 0.0.40
codegen_flags: <defaults>
</compile_context>

<pallas_src>
import functools

import jax
import jax.numpy as jnp
from jax.experimental import pallas as pl
from jax.experimental.pallas import tpu as pltpu


def _round_up(x, m):
    return (x + m - 1) // m * m


def _ceum_kernel(xt_ref, w1_ref, b1_ref, w2_ref, b2_ref, w3_ref, b3_ref,
                 w4_ref, b4_ref, wl_ref, bl_ref, out_ref, *, treat_row):
    """One batch tile, transposed layout (features on sublanes, batch on lanes).

    xt_ref : (d_pad, TB) f32, row `treat_row` holds is_treat in {0, 1}
    w*_ref : (out, in)   f32 resident weights;  b*_ref: (out, 1)
    wl_ref : (H//4, 1)   s_logit weight as a column;  bl_ref: (1, 1)
    out_ref: (2, TB)     row 0 = s_logit, row 1 = y1 - y0 (uplift)
    """
    xt = xt_ref[...]                                   # (d_pad, TB)
    tb = xt.shape[1]
    t = xt[treat_row:treat_row + 1, :]                 # (1, TB), values in {0,1}

    # fc1: W1 already contains the treatment column, so ONE matmul produces the
    # treated-as-given pre-activation; the counterfactual branch only needs a
    # rank-1 correction (1 - 2t) * w1_treat.
    pre = jnp.dot(w1_ref[...], xt, preferred_element_type=jnp.float32)   # (H, TB)
    pre_t = pre + b1_ref[...]
    w1t = w1_ref[:, treat_row:treat_row + 1]           # (H, 1) treatment column
    pre_c = pre_t + (1.0 - 2.0 * t) * w1t
    # Fuse both branches along the lane axis -> fc2..fc4 are single matmuls.
    h = jnp.maximum(jnp.concatenate([pre_t, pre_c], axis=1), 0.0)        # (H, 2TB)

    def dense_relu(v, w_ref, b_ref):
        out = jnp.dot(w_ref[...], v, preferred_element_type=jnp.float32)
        return jnp.maximum(out + b_ref[...], 0.0)

    h = dense_relu(h, w2_ref, b2_ref)                  # (H,    2TB)
    h = dense_relu(h, w3_ref, b3_ref)                  # (H//2, 2TB)
    h = dense_relu(h, w4_ref, b4_ref)                  # (H//4, 2TB)
    # TODO(synk): is_self=True branch (s_fc5) omitted - unreachable in the
    # original module (its nn.Linear is constructed with a float width).

    # s_logit (out_dim = 1): VPU broadcast-mul + 8-sublane reduce instead of a
    # pathological M=1 MXU pass (overlaps with the MXU work above).
    logits = jnp.sum(h * wl_ref[...], axis=0, keepdims=True) + bl_ref[...]  # (1, 2TB)

    s_logit = logits[:, :tb]
    _s_logit = logits[:, tb:]
    s_prob = jax.nn.sigmoid(s_logit)
    _s_prob = jax.nn.sigmoid(_s_logit)
    # y1 - y0 == (2t - 1) * (s_prob - _s_prob); bit-exact for t in {0, 1}.
    uplift = (2.0 * t - 1.0) * (s_prob - _s_prob)

    out_ref[...] = jnp.concatenate([s_logit, uplift], axis=0)            # (2, TB)


def ceum_forward(feature_list, is_treat, feature_list1, is_treat1, params,
                 *, block_b=2048):
    """Mirrors Ceum.forward (is_self=False, relu).

    Returns (s_logit, y1 - y0, s_logit1, y11 - y10), each (batch, 1) float32.
    """
    b0, d = feature_list.shape
    nb1 = feature_list1.shape[0]
    total = b0 + nb1
    h_dim = params['s_fc1'][0].shape[0]

    # ---- single launch: both calls stacked along the batch (lane) axis ----
    x_all = jnp.concatenate([feature_list, feature_list1], axis=0).astype(jnp.float32)
    t_all = jnp.concatenate([is_treat, is_treat1], axis=0).astype(jnp.float32)

    d_in = d + 1                                # features + treatment column
    d_pad = _round_up(d_in, 8)                  # f32 sublane multiple
    xt = jnp.concatenate(
        [x_all.T, t_all.reshape(1, total),
         jnp.zeros((d_pad - d_in, total), jnp.float32)], axis=0)   # (d_pad, total)

    # ---- batch tiling: large lane-dense tiles, bounded pad waste ----
    num_tiles = max(1, -(-total // block_b))
    if num_tiles == 1 and total >= 512:
        num_tiles = 2                           # keep both v7x TensorCores busy
    per_tile = -(-total // num_tiles)
    lane_mult = 256 if per_tile > 128 else 128  # 256 fills v6e/v7x MXU width
    tile_b = max(128, _round_up(per_tile, lane_mult))
    padded = num_tiles * tile_b
    if padded != total:
        xt = jnp.pad(xt, ((0, 0), (0, padded - total)))

    # ---- weights in (out_features, in_features) layout, biases as columns ----
    w1, b1 = params['s_fc1']
    w2, b2 = params['s_fc2']
    w3, b3 = params['s_fc3']
    w4, b4 = params['s_fc4']
    wl, bl = params['s_logit']

    def col(b):
        return b.reshape(-1, 1).astype(jnp.float32)

    weights = (jnp.pad(w1.astype(jnp.float32), ((0, 0), (0, d_pad - d_in))), col(b1),
               w2.astype(jnp.float32), col(b2),
               w3.astype(jnp.float32), col(b3),
               w4.astype(jnp.float32), col(b4),
               wl.astype(jnp.float32).T, col(bl))   # wl passed as (H//4, 1) column

    x_spec = pl.BlockSpec((d_pad, tile_b), lambda i: (0, i))
    out_spec = pl.BlockSpec((2, tile_b), lambda i: (0, i))
    w_specs = [pl.BlockSpec(w.shape, lambda i: (0, 0)) for w in weights]

    macs_per_sample = (d_pad * h_dim
                       + 2 * (h_dim * h_dim + h_dim * (h_dim // 2)
                              + (h_dim // 2) * (h_dim // 4) + (h_dim // 4)))
    cost = pl.CostEstimate(
        flops=2 * padded * macs_per_sample,
        transcendentals=2 * padded,
        bytes_accessed=padded * (d_pad + 2) * 4 + sum(int(w.size) * 4 for w in weights))

    out = pl.pallas_call(
        functools.partial(_ceum_kernel, treat_row=d),
        out_shape=jax.ShapeDtypeStruct((2, padded), jnp.float32),
        grid=(num_tiles,),
        in_specs=[x_spec] + w_specs,
        out_specs=out_spec,
        compiler_params=pltpu.CompilerParams(dimension_semantics=("parallel",)),
        cost_estimate=cost,
    )(xt, *weights)

    s_logit = out[0:1, :b0].T
    uplift = out[1:2, :b0].T
    s_logit1 = out[0:1, b0:total].T
    uplift1 = out[1:2, b0:total].T
    return s_logit, uplift, s_logit1, uplift1


def _init_params(key, input_dim, h_dim):
    """Synthetic parameters matching the nn.Module layer shapes.
    Weights are PyTorch-style (out_features, in_features); biases (out_features,)."""
    layer_dims = {
        's_fc1': (h_dim, input_dim + 1),
        's_fc2': (h_dim, h_dim),
        's_fc3': (h_dim // 2, h_dim),
        's_fc4': (h_dim // 4, h_dim // 2),
        's_logit': (1, h_dim // 4),
    }
    params = {}
    for name, (dout, din) in layer_dims.items():
        key, kw, kb = jax.random.split(key, 3)
        bound = 1.0 / float(din) ** 0.5
        params[name] = (
            jax.random.uniform(kw, (dout, din), jnp.float32, -bound, bound),
            jax.random.uniform(kb, (dout,), jnp.float32, -bound, bound),
        )
    return params


def _reference_forward(feature_list, is_treat, feature_list1, is_treat1, params):
    """Pure-JAX float32 reference mirroring the PyTorch forward
    (is_self=False, act_type='relu')."""
    def linear(x, name):
        w, b = params[name]
        return jnp.dot(x, w.T) + b

    def mlp(xt):
        h = xt
        for name in ('s_fc1', 's_fc2', 's_fc3', 's_fc4'):
            h = jnp.maximum(linear(h, name), 0.0)
        return linear(h, 's_logit')

    def branch(x, t):
        t = t.reshape(-1, 1)
        s_logit = mlp(jnp.concatenate([x, t], axis=1))
        _s_logit = mlp(jnp.concatenate([x, 1.0 - t], axis=1))
        s_prob = jax.nn.sigmoid(s_logit)
        _s_prob = jax.nn.sigmoid(_s_logit)
        y0 = t * _s_prob + (1.0 - t) * s_prob
        y1 = t * s_prob + (1.0 - t) * _s_prob
        return s_logit, y1 - y0

    a, b = branch(feature_list, is_treat)
    c, e = branch(feature_list1, is_treat1)
    return a, b, c, e


if __name__ == "__main__":
    import numpy as np

    batch = 16
    input_dim = 15      # + treatment column -> 16 input features
    h_dim = 32

    key = jax.random.PRNGKey(0)
    kp, kx0, kt0, kx1, kt1 = jax.random.split(key, 5)

    params = _init_params(kp, input_dim, h_dim)
    feature_list = jax.random.normal(kx0, (batch, input_dim), jnp.float32)
    is_treat = jax.random.bernoulli(kt0, 0.5, (batch,)).astype(jnp.float32)
    feature_list1 = jax.random.normal(kx1, (batch, input_dim), jnp.float32)
    is_treat1 = jax.random.bernoulli(kt1, 0.5, (batch,)).astype(jnp.float32)

    fwd = jax.jit(ceum_forward)
    outs = jax.block_until_ready(
        fwd(feature_list, is_treat, feature_list1, is_treat1, params))

    refs = _reference_forward(feature_list, is_treat, feature_list1, is_treat1,
                              params)
    # Tolerance covers possible bf16-pass rounding of f32 matmuls (default MXU
    # precision) on either side; wiring/semantics errors would be O(1).
    for o, r in zip(outs, refs):
        np.testing.assert_allclose(np.asarray(o), np.asarray(r),
                                   rtol=1e-2, atol=1e-2)

    print("KERNEL_OK")
</pallas_src>

<mosaic_0001>
module attributes {stable_mosaic.version = 11 : i64} {
  func.func @_ceum_kernel(%arg0: i32, %arg1: memref<16x128xf32, #tpu.memory_space<vmem>>, %arg2: memref<32x16xf32, #tpu.memory_space<vmem>>, %arg3: memref<32x1xf32, #tpu.memory_space<vmem>>, %arg4: memref<32x32xf32, #tpu.memory_space<vmem>>, %arg5: memref<32x1xf32, #tpu.memory_space<vmem>>, %arg6: memref<16x32xf32, #tpu.memory_space<vmem>>, %arg7: memref<16x1xf32, #tpu.memory_space<vmem>>, %arg8: memref<8x16xf32, #tpu.memory_space<vmem>>, %arg9: memref<8x1xf32, #tpu.memory_space<vmem>>, %arg10: memref<8x1xf32, #tpu.memory_space<vmem>>, %arg11: memref<1x1xf32, #tpu.memory_space<vmem>>, %arg12: memref<2x128xf32, #tpu.memory_space<vmem>>) attributes {dimension_semantics = [#tpu.dimension_semantics<parallel>], iteration_bounds = array<i64: 1>, scalar_prefetch = 0 : i64, scratch_operands = 0 : i64, tpu.core_type = #tpu.core_type<tc>, window_params = [{transform_indices = @transform_0, window_bounds = array<i64: 16, 128>}, {pipeline_mode = #tpu.pipeline_mode<synchronous>, transform_indices = @transform_1, window_bounds = array<i64: 32, 16>}, {pipeline_mode = #tpu.pipeline_mode<synchronous>, transform_indices = @transform_2, window_bounds = array<i64: 32, 1>}, {pipeline_mode = #tpu.pipeline_mode<synchronous>, transform_indices = @transform_3, window_bounds = array<i64: 32, 32>}, {pipeline_mode = #tpu.pipeline_mode<synchronous>, transform_indices = @transform_4, window_bounds = array<i64: 32, 1>}, {pipeline_mode = #tpu.pipeline_mode<synchronous>, transform_indices = @transform_5, window_bounds = array<i64: 16, 32>}, {pipeline_mode = #tpu.pipeline_mode<synchronous>, transform_indices = @transform_6, window_bounds = array<i64: 16, 1>}, {pipeline_mode = #tpu.pipeline_mode<synchronous>, transform_indices = @transform_7, window_bounds = array<i64: 8, 16>}, {pipeline_mode = #tpu.pipeline_mode<synchronous>, transform_indices = @transform_8, window_bounds = array<i64: 8, 1>}, {pipeline_mode = #tpu.pipeline_mode<synchronous>, transform_indices = @transform_9, window_bounds = array<i64: 8, 1>}, {pipeline_mode = #tpu.pipeline_mode<synchronous>, transform_indices = @transform_10, window_bounds = array<i64: 1, 1>}, {transform_indices = @transform_11, window_bounds = array<i64: 2, 128>}]} {
    %c0 = arith.constant 0 : index
    %c0_0 = arith.constant 0 : index
    %0 = vector.load %arg1[%c0, %c0_0] : memref<16x128xf32, #tpu.memory_space<vmem>>, vector<16x128xf32>
    %1 = vector.extract_strided_slice %0 {offsets = [15, 0], sizes = [1, 128], strides = [1, 1]} : vector<16x128xf32> to vector<1x128xf32>
    %c0_1 = arith.constant 0 : index
    %c0_2 = arith.constant 0 : index
    %2 = vector.load %arg2[%c0_1, %c0_2] : memref<32x16xf32, #tpu.memory_space<vmem>>, vector<32x16xf32>
    %cst = arith.constant dense<0.000000e+00> : vector<32x128xf32>
    %3 = tpu.matmul %2, %0, %cst {dimension_numbers = #tpu.dot_dimension_numbers<[1], [0], [0], [1], [0, 0, 1, 1], [], []>} : vector<32x16xf32>, vector<16x128xf32>, vector<32x128xf32> -> vector<32x128xf32>
    %c0_3 = arith.constant 0 : index
    %c0_4 = arith.constant 0 : index
    %4 = vector.load %arg3[%c0_3, %c0_4] : memref<32x1xf32, #tpu.memory_space<vmem>>, vector<32x1xf32>
    %5 = vector.broadcast %4 : vector<32x1xf32> to vector<32x128xf32>
    %6 = arith.addf %3, %5 : vector<32x128xf32>
    %c0_5 = arith.constant 0 : index
    %c15 = arith.constant 15 : index
    %7 = vector.load %arg2[%c0_5, %c15] : memref<32x16xf32, #tpu.memory_space<vmem>>, vector<32x1xf32>
    %cst_6 = arith.constant 2.000000e+00 : f32
    %8 = vector.broadcast %cst_6 : f32 to vector<1x128xf32>
    %9 = arith.mulf %8, %1 : vector<1x128xf32>
    %cst_7 = arith.constant 1.000000e+00 : f32
    %10 = vector.broadcast %cst_7 : f32 to vector<1x128xf32>
    %11 = arith.subf %10, %9 : vector<1x128xf32>
    %12 = vector.broadcast %11 : vector<1x128xf32> to vector<32x128xf32>
    %13 = vector.broadcast %7 : vector<32x1xf32> to vector<32x128xf32>
    %14 = arith.mulf %12, %13 : vector<32x128xf32>
    %15 = arith.addf %6, %14 : vector<32x128xf32>
    %16 = tpu.concatenate %6, %15 in 1 : vector<32x128xf32>, vector<32x128xf32> -> vector<32x256xf32>
    %cst_8 = arith.constant 0.000000e+00 : f32
    %17 = vector.broadcast %cst_8 : f32 to vector<32x256xf32>
    %18 = arith.maximumf %16, %17 : vector<32x256xf32>
    %c0_9 = arith.constant 0 : index
    %c0_10 = arith.constant 0 : index
    %19 = vector.load %arg4[%c0_9, %c0_10] : memref<32x32xf32, #tpu.memory_space<vmem>>, vector<32x32xf32>
    %cst_11 = arith.constant dense<0.000000e+00> : vector<32x256xf32>
    %20 = tpu.matmul %19, %18, %cst_11 {dimension_numbers = #tpu.dot_dimension_numbers<[1], [0], [0], [1], [0, 0, 1, 1], [], []>} : vector<32x32xf32>, vector<32x256xf32>, vector<32x256xf32> -> vector<32x256xf32>
    %c0_12 = arith.constant 0 : index
    %c0_13 = arith.constant 0 : index
    %21 = vector.load %arg5[%c0_12, %c0_13] : memref<32x1xf32, #tpu.memory_space<vmem>>, vector<32x1xf32>
    %22 = vector.broadcast %21 : vector<32x1xf32> to vector<32x256xf32>
    %23 = arith.addf %20, %22 : vector<32x256xf32>
    %cst_14 = arith.constant 0.000000e+00 : f32
    %24 = vector.broadcast %cst_14 : f32 to vector<32x256xf32>
    %25 = arith.maximumf %23, %24 : vector<32x256xf32>
    %c0_15 = arith.constant 0 : index
    %c0_16 = arith.constant 0 : index
    %26 = vector.load %arg6[%c0_15, %c0_16] : memref<16x32xf32, #tpu.memory_space<vmem>>, vector<16x32xf32>
    %cst_17 = arith.constant dense<0.000000e+00> : vector<16x256xf32>
    %27 = tpu.matmul %26, %25, %cst_17 {dimension_numbers = #tpu.dot_dimension_numbers<[1], [0], [0], [1], [0, 0, 1, 1], [], []>} : vector<16x32xf32>, vector<32x256xf32>, vector<16x256xf32> -> vector<16x256xf32>
    %c0_18 = arith.constant 0 : index
    %c0_19 = arith.constant 0 : index
    %28 = vector.load %arg7[%c0_18, %c0_19] : memref<16x1xf32, #tpu.memory_space<vmem>>, vector<16x1xf32>
    %29 = vector.broadcast %28 : vector<16x1xf32> to vector<16x256xf32>
    %30 = arith.addf %27, %29 : vector<16x256xf32>
    %cst_20 = arith.constant 0.000000e+00 : f32
    %31 = vector.broadcast %cst_20 : f32 to vector<16x256xf32>
    %32 = arith.maximumf %30, %31 : vector<16x256xf32>
    %c0_21 = arith.constant 0 : index
    %c0_22 = arith.constant 0 : index
    %33 = vector.load %arg8[%c0_21, %c0_22] : memref<8x16xf32, #tpu.memory_space<vmem>>, vector<8x16xf32>
    %cst_23 = arith.constant dense<0.000000e+00> : vector<8x256xf32>
    %34 = tpu.matmul %33, %32, %cst_23 {dimension_numbers = #tpu.dot_dimension_numbers<[1], [0], [0], [1], [0, 0, 1, 1], [], []>} : vector<8x16xf32>, vector<16x256xf32>, vector<8x256xf32> -> vector<8x256xf32>
    %c0_24 = arith.constant 0 : index
    %c0_25 = arith.constant 0 : index
    %35 = vector.load %arg9[%c0_24, %c0_25] : memref<8x1xf32, #tpu.memory_space<vmem>>, vector<8x1xf32>
    %36 = vector.broadcast %35 : vector<8x1xf32> to vector<8x256xf32>
    %37 = arith.addf %34, %36 : vector<8x256xf32>
    %cst_26 = arith.constant 0.000000e+00 : f32
    %38 = vector.broadcast %cst_26 : f32 to vector<8x256xf32>
    %39 = arith.maximumf %37, %38 : vector<8x256xf32>
    %c0_27 = arith.constant 0 : index
    %c0_28 = arith.constant 0 : index
    %40 = vector.load %arg10[%c0_27, %c0_28] : memref<8x1xf32, #tpu.memory_space<vmem>>, vector<8x1xf32>
    %41 = vector.broadcast %40 : vector<8x1xf32> to vector<8x256xf32>
    %42 = arith.mulf %39, %41 : vector<8x256xf32>
    %cst_29 = arith.constant dense<0.000000e+00> : vector<256xf32>
    %43 = vector.multi_reduction <add>, %42, %cst_29 [0] : vector<8x256xf32> to vector<256xf32>
    %44 = vector.shape_cast %43 : vector<256xf32> to vector<1x256xf32>
    %c0_30 = arith.constant 0 : index
    %c0_31 = arith.constant 0 : index
    %45 = vector.load %arg11[%c0_30, %c0_31] : memref<1x1xf32, #tpu.memory_space<vmem>>, vector<1x1xf32>
    %46 = vector.broadcast %45 : vector<1x1xf32> to vector<1x256xf32>
    %47 = arith.addf %44, %46 : vector<1x256xf32>
    %48 = vector.extract_strided_slice %47 {offsets = [0, 0], sizes = [1, 128], strides = [1, 1]} : vector<1x256xf32> to vector<1x128xf32>
    %49 = vector.extract_strided_slice %47 {offsets = [0, 128], sizes = [1, 128], strides = [1, 1]} : vector<1x256xf32> to vector<1x128xf32>
    %50 = arith.negf %48 : vector<1x128xf32>
    %51 = math.exp %50 : vector<1x128xf32>
    %cst_32 = arith.constant 1.000000e+00 : f32
    %52 = vector.broadcast %cst_32 : f32 to vector<1x128xf32>
    %53 = arith.addf %52, %51 : vector<1x128xf32>
    %54 = arith.divf %52, %53 : vector<1x128xf32>
    %55 = arith.negf %49 : vector<1x128xf32>
    %56 = math.exp %55 : vector<1x128xf32>
    %cst_33 = arith.constant 1.000000e+00 : f32
    %57 = vector.broadcast %cst_33 : f32 to vector<1x128xf32>
    %58 = arith.addf %57, %56 : vector<1x128xf32>
    %59 = arith.divf %57, %58 : vector<1x128xf32>
    %cst_34 = arith.constant 2.000000e+00 : f32
    %60 = vector.broadcast %cst_34 : f32 to vector<1x128xf32>
    %61 = arith.mulf %60, %1 : vector<1x128xf32>
    %cst_35 = arith.constant 1.000000e+00 : f32
    %62 = vector.broadcast %cst_35 : f32 to vector<1x128xf32>
    %63 = arith.subf %61, %62 : vector<1x128xf32>
    %64 = arith.subf %54, %59 : vector<1x128xf32>
    %65 = arith.mulf %63, %64 : vector<1x128xf32>
    %66 = tpu.concatenate %48, %65 in 0 : vector<1x128xf32>, vector<1x128xf32> -> vector<2x128xf32>
    %c0_36 = arith.constant 0 : index
    %c0_37 = arith.constant 0 : index
    %67 = vector.load %arg12[%c0_36, %c0_37] : memref<2x128xf32, #tpu.memory_space<vmem>>, vector<2x128xf32>
    tpu.vector_store %arg12[%c0_36, %c0_37], %66 {strides = array<i32>} : memref<2x128xf32, #tpu.memory_space<vmem>>, vector<2x128xf32>,
    return
  }
  func.func @transform_0(%arg0: i32) -> (i32, i32) {
    %c0_i32 = arith.constant 0 : i32
    %c0_i32_0 = arith.constant 0 : i32
    return %c0_i32, %arg0 : i32, i32
  }
  func.func @transform_1(%arg0: i32) -> (i32, i32) {
    %c0_i32 = arith.constant 0 : i32
    %c0_i32_0 = arith.constant 0 : i32
    %c0_i32_1 = arith.constant 0 : i32
    return %c0_i32, %c0_i32_0 : i32, i32
  }
  func.func @transform_2(%arg0: i32) -> (i32, i32) {
    %c0_i32 = arith.constant 0 : i32
    %c0_i32_0 = arith.constant 0 : i32
    %c0_i32_1 = arith.constant 0 : i32
    return %c0_i32, %c0_i32_0 : i32, i32
  }
  func.func @transform_3(%arg0: i32) -> (i32, i32) {
    %c0_i32 = arith.constant 0 : i32
    %c0_i32_0 = arith.constant 0 : i32
    %c0_i32_1 = arith.constant 0 : i32
    return %c0_i32, %c0_i32_0 : i32, i32
  }
  func.func @transform_4(%arg0: i32) -> (i32, i32) {
    %c0_i32 = arith.constant 0 : i32
    %c0_i32_0 = arith.constant 0 : i32
    %c0_i32_1 = arith.constant 0 : i32
    return %c0_i32, %c0_i32_0 : i32, i32
  }
  func.func @transform_5(%arg0: i32) -> (i32, i32) {
    %c0_i32 = arith.constant 0 : i32
    %c0_i32_0 = arith.constant 0 : i32
    %c0_i32_1 = arith.constant 0 : i32
    return %c0_i32, %c0_i32_0 : i32, i32
  }
  func.func @transform_6(%arg0: i32) -> (i32, i32) {
    %c0_i32 = arith.constant 0 : i32
    %c0_i32_0 = arith.constant 0 : i32
    %c0_i32_1 = arith.constant 0 : i32
    return %c0_i32, %c0_i32_0 : i32, i32
  }
  func.func @transform_7(%arg0: i32) -> (i32, i32) {
    %c0_i32 = arith.constant 0 : i32
    %c0_i32_0 = arith.constant 0 : i32
    %c0_i32_1 = arith.constant 0 : i32
    return %c0_i32, %c0_i32_0 : i32, i32
  }
  func.func @transform_8(%arg0: i32) -> (i32, i32) {
    %c0_i32 = arith.constant 0 : i32
    %c0_i32_0 = arith.constant 0 : i32
    %c0_i32_1 = arith.constant 0 : i32
    return %c0_i32, %c0_i32_0 : i32, i32
  }
  func.func @transform_9(%arg0: i32) -> (i32, i32) {
    %c0_i32 = arith.constant 0 : i32
    %c0_i32_0 = arith.constant 0 : i32
    %c0_i32_1 = arith.constant 0 : i32
    return %c0_i32, %c0_i32_0 : i32, i32
  }
  func.func @transform_10(%arg0: i32) -> (i32, i32) {
    %c0_i32 = arith.constant 0 : i32
    %c0_i32_0 = arith.constant 0 : i32
    %c0_i32_1 = arith.constant 0 : i32
    return %c0_i32, %c0_i32_0 : i32, i32
  }
  func.func @transform_11(%arg0: i32) -> (i32, i32) {
    %c0_i32 = arith.constant 0 : i32
    %c0_i32_0 = arith.constant 0 : i32
    return %c0_i32, %arg0 : i32, i32
  }
}

</mosaic_0001>

<llo_original>
// kernel: ceum_forward.1
$region0: #{ceum_forward.1}
  #allocation0 [shape = 'u32[]', space=smem, size = 0x4, offset = 0x4, fixed_abs, tag = 'smem constant byte address 0x4 - core index']
  #allocation1 [shape = 'u32[144,128]{1,0:T(1,128)}', space=vmem, size = 0x12000, scoped, tag = 'internal scratch']
  #allocation2 [shape = 'f32[1,1]{1,0:T(1,128)S(1)}', space=vmem, size = 0x200, scoped, tag = 'scoped memory for ceum_forward.1']
  %s0 = inlined_call_operand.vmem [shape: f32[16,128], index: 0, kind: input, shape index: {}]
  %s1 = inlined_call_operand.vmem [shape: f32[32,16], index: 1, kind: input, shape index: {}]
  %s2 = inlined_call_operand.vmem [shape: f32[32,1], index: 2, kind: input, shape index: {}]
  %s3 = inlined_call_operand.vmem [shape: f32[32,32], index: 3, kind: input, shape index: {}]
  %s4 = inlined_call_operand.vmem [shape: f32[32,1], index: 4, kind: input, shape index: {}]
  %s5 = inlined_call_operand.vmem [shape: f32[16,32], index: 5, kind: input, shape index: {}]
  %s6 = inlined_call_operand.vmem [shape: f32[16,1], index: 6, kind: input, shape index: {}]
  %s7 = inlined_call_operand.vmem [shape: f32[8,16], index: 7, kind: input, shape index: {}]
  %s8 = inlined_call_operand.vmem [shape: f32[8,1], index: 8, kind: input, shape index: {}]
  %s9 = inlined_call_operand.vmem [shape: f32[8,1], index: 9, kind: input, shape index: {}]
  %s10 = inlined_call_operand.<no memory space> [shape: f32[1,1], index: 10, kind: input, shape index: {}]
  %s11 = inlined_call_operand.vmem [shape: f32[2,128], index: 11, kind: output, shape index: {}]
  %s12 = sld [smem:[#allocation0]]
  $region54: #{ceum_forward.1} parent=0
    _
  %s14 = ssub.s32 1, %s12
  %s15 = scalar_select 0, %s14, %s12
  %v16 = vstv %s10
  %17 = vst [vmem:[#allocation2] sm:$0x1] %v16
  // Predicated region
  $region2: #{ceum_forward.1} parent=0 // pred_check
    _
  $region3: #{ceum_forward.1} parent=0 // pred_check_branch
    %19 = sbr.rel (0) target = $region5
  $region4: #{ceum_forward.1} parent=0 // pred_region
    _
  $region5: #{ceum_forward.1} parent=0 // pred_fallthru
    _
  // Predicated region
  $region6: #{ceum_forward.1} parent=0 // pred_check
    _
  $region7: #{ceum_forward.1} parent=0 // pred_check_branch
    %21 = sbr.rel (0) target = $region9
  $region8: #{ceum_forward.1} parent=0 // pred_region
    _
  $region9: #{ceum_forward.1} parent=0 // pred_fallthru
    _
  // Predicated region
  $region10: #{ceum_forward.1} parent=0 // pred_check
    _
  $region11: #{ceum_forward.1} parent=0 // pred_check_branch
    %23 = sbr.rel (0) target = $region13
  $region12: #{ceum_forward.1} parent=0 // pred_region
    _
  $region13: #{ceum_forward.1} parent=0 // pred_fallthru
    _
  // Predicated region
  $region14: #{ceum_forward.1} parent=0 // pred_check
    _
  $region15: #{ceum_forward.1} parent=0 // pred_check_branch
    %25 = sbr.rel (0) target = $region17
  $region16: #{ceum_forward.1} parent=0 // pred_region
    _
  $region17: #{ceum_forward.1} parent=0 // pred_fallthru
    _
  // Predicated region
  $region18: #{ceum_forward.1} parent=0 // pred_check
    _
  $region19: #{ceum_forward.1} parent=0 // pred_check_branch
    %27 = sbr.rel (0) target = $region21
  $region20: #{ceum_forward.1} parent=0 // pred_region
    _
  $region21: #{ceum_forward.1} parent=0 // pred_fallthru
    _
  // Predicated region
  $region22: #{ceum_forward.1} parent=0 // pred_check
    _
  $region23: #{ceum_forward.1} parent=0 // pred_check_branch
    %29 = sbr.rel (0) target = $region25
  $region24: #{ceum_forward.1} parent=0 // pred_region
    _
  $region25: #{ceum_forward.1} parent=0 // pred_fallthru
    _
  // Predicated region
  $region26: #{ceum_forward.1} parent=0 // pred_check
    _
  $region27: #{ceum_forward.1} parent=0 // pred_check_branch
    %31 = sbr.rel (0) target = $region29
  $region28: #{ceum_forward.1} parent=0 // pred_region
    _
  $region29: #{ceum_forward.1} parent=0 // pred_fallthru
    _
  // Predicated region
  $region30: #{ceum_forward.1} parent=0 // pred_check
    _
  $region31: #{ceum_forward.1} parent=0 // pred_check_branch
    %33 = sbr.rel (0) target = $region33
  $region32: #{ceum_forward.1} parent=0 // pred_region
    _
  $region33: #{ceum_forward.1} parent=0 // pred_fallthru
    _
  // Predicated region
  $region34: #{ceum_forward.1} parent=0 // pred_check
    _
  $region35: #{ceum_forward.1} parent=0 // pred_check_branch
    %35 = sbr.rel (0) target = $region37
  $region36: #{ceum_forward.1} parent=0 // pred_region
    _
  $region37: #{ceum_forward.1} parent=0 // pred_fallthru
    _
  // Predicated region
  $region38: #{ceum_forward.1} parent=0 // pred_check
    _
  $region39: #{ceum_forward.1} parent=0 // pred_check_branch
    %37 = sbr.rel (0) target = $region41
  $region40: #{ceum_forward.1} parent=0 // pred_region
    _
  $region41: #{ceum_forward.1} parent=0 // pred_fallthru
    _
  // Predicated region
  $region42: #{ceum_forward.1} parent=0 // pred_check
    _
  $region43: #{ceum_forward.1} parent=0 // pred_check_branch
    %39 = sbr.rel (0) target = $region45
  $region44: #{ceum_forward.1} parent=0 // pred_region
    _
  $region45: #{ceum_forward.1} parent=0 // pred_fallthru
    _
  %v40 = vld [vmem:[%s0] sm:$0xff]
  %v41 = vld [vmem:[%s0 + $0x8] sm:$0xff]
  %v42 = vld [vmem:[%s1] sm:$0xff]
  %v43 = vld [vmem:[%s1 + $0x8] sm:$0xff]
  %v44 = vld [vmem:[%s1 + $0x10] sm:$0xff]
  %v45 = vld [vmem:[%s1 + $0x18] sm:$0xff]
  %v46 = vld [vmem:[%s2] sm:$0xff]
  %v47 = vld [vmem:[%s2 + $0x8] sm:$0xff]
  %v48 = vld [vmem:[%s2 + $0x10] sm:$0xff]
  %v49 = vld [vmem:[%s2 + $0x18] sm:$0xff]
  %51 = vset.pattern.permute.xlu0 0
  %52 = vperm.xlu0 %51, %v46
  %v53 = vpop.permute.xlu0 %52
  %56 = vset.pattern.permute.xlu0 0
  %57 = vperm.xlu0 %56, %v47
  %v58 = vpop.permute.xlu0 %57
  %61 = vset.pattern.permute.xlu0 0
  %62 = vperm.xlu0 %61, %v48
  %v63 = vpop.permute.xlu0 %62
  %66 = vset.pattern.permute.xlu0 0
  %67 = vperm.xlu0 %66, %v49
  %v68 = vpop.permute.xlu0 %67
  %vm70 = vcmask 130048
  %v72 = vsel %vm70, %v42, 0
  %v75 = vsel %vm70, %v43, 0
  %v78 = vsel %vm70, %v44, 0
  %v81 = vsel %vm70, %v45, 0
  %83 = vmatprep.subr.mxu0 0.0
  %84 = vmatpush1.msra.mxu0 %v40
  %85 = vmatprep.subr.mxu0 0.0
  %86 = vmatpush1.msra.mxu0 %v41
  %87 = vmatprep.subr.mxu0 0.0
  %88 = vmatpush1.msra.mxu0 0.0
  %89 = vmatprep.subr.mxu0 0.0
  %90 = vmatpush1.msra.mxu0 0.0
  %91 = vmatprep.subr.mxu0 0.0
  %92 = vmatpush1.msra.mxu0 0.0
  %93 = vmatprep.subr.mxu0 0.0
  %94 = vmatpush1.msra.mxu0 0.0
  %95 = vmatprep.subr.mxu0 0.0
  %96 = vmatpush1.msra.mxu0 0.0
  %97 = vmatprep.subr.mxu0 0.0
  %98 = vmatpush1.msra.mxu0 0.0
  %99 = vmatprep.subr.mxu0 0.0
  %100 = vmatpush1.msra.mxu0 0.0
  %101 = vmatprep.subr.mxu0 0.0
  %102 = vmatpush1.msra.mxu0 0.0
  %103 = vmatprep.subr.mxu0 0.0
  %104 = vmatpush1.msra.mxu0 0.0
  %105 = vmatprep.subr.mxu0 0.0
  %106 = vmatpush1.msra.mxu0 0.0
  %107 = vmatprep.subr.mxu0 0.0
  %108 = vmatpush1.msra.mxu0 0.0
  %109 = vmatprep.subr.mxu0 0.0
  %110 = vmatpush1.msra.mxu0 0.0
  %111 = vmatprep.subr.mxu0 0.0
  %112 = vmatpush1.msra.mxu0 0.0
  %113 = vmatprep.subr.mxu0 0.0
  %114 = vmatpush1.msra.mxu0 0.0
  %115 = vmatprep.subr.mxu0 0.0
  %116 = vmatpush1.msra.mxu0 0.0
  %117 = vmatprep.subr.mxu0 0.0
  %118 = vmatpush1.msra.mxu0 0.0
  %119 = vmatprep.subr.mxu0 0.0
  %120 = vmatpush1.msra.mxu0 0.0
  %121 = vmatprep.subr.mxu0 0.0
  %122 = vmatpush1.msra.mxu0 0.0
  %123 = vmatprep.subr.mxu0 0.0
  %124 = vmatpush1.msra.mxu0 0.0
  %125 = vmatprep.subr.mxu0 0.0
  %126 = vmatpush1.msra.mxu0 0.0
  %127 = vmatprep.subr.mxu0 0.0
  %128 = vmatpush1.msra.mxu0 0.0
  %129 = vmatprep.subr.mxu0 0.0
  %130 = vmatpush1.msra.mxu0 0.0
  %131 = vmatprep.subr.mxu0 0.0
  %132 = vmatpush1.msra.mxu0 0.0
  %133 = vmatprep.subr.mxu0 0.0
  %134 = vmatpush1.msra.mxu0 0.0
  %135 = vmatprep.subr.mxu0 0.0
  %136 = vmatpush1.msra.mxu0 0.0
  %137 = vmatprep.subr.mxu0 0.0
  %138 = vmatpush1.msra.mxu0 0.0
  %139 = vmatprep.subr.mxu0 0.0
  %140 = vmatpush1.msra.mxu0 0.0
  %141 = vmatprep.subr.mxu0 0.0
  %142 = vmatpush1.msra.mxu0 0.0
  %143 = vmatprep.subr.mxu0 0.0
  %144 = vmatpush1.msra.mxu0 0.0
  %145 = vmatprep.subr.mxu0 0.0
  %146 = vmatpush1.msra.mxu0 0.0
  %147 = vmatprep.mubr.f32.mxu0 0.0
  %148 = vmatmul.mubr.f32.gmra.mrb[0].mxu0 %v72
  %v149 = vpop.f32.mrb[0].mxu0
  %v150 = vadd.f32 %v53, %v149
  %v151 = vpop.f32.mrb[0].mxu0
  %152 = vmatprep.mubr.f32.mxu0 0.0
  %153 = vmatmul.mubr.f32.gmra.mrb[0].mxu0 %v75
  %v154 = vpop.f32.mrb[0].mxu0
  %v155 = vadd.f32 %v58, %v154
  %v156 = vpop.f32.mrb[0].mxu0
  %157 = vmatprep.mubr.f32.mxu0 0.0
  %158 = vmatmul.mubr.f32.gmra.mrb[0].mxu0 %v78
  %v159 = vpop.f32.mrb[0].mxu0
  %v160 = vadd.f32 %v63, %v159
  %v161 = vpop.f32.mrb[0].mxu0
  %162 = vmatprep.mubr.f32.mxu0 0.0
  %163 = vmatmul.mubr.f32.gmra.mrb[0].mxu0 %v81
  %v164 = vpop.f32.mrb[0].mxu0
  %v165 = vadd.f32 %v68, %v164
  %v166 = vpop.f32.mrb[0].mxu0
  %167 = vdwg.mxu0
  %v168 = vmul.f32 %v41, 2.0
  %v169 = vsub.f32 1.0, %v168
  %v170 = vlaneseq
  %v171 = vshrl.u32 %v170, 7
  %v172 = vsub.s32 7, %v171
  %v173 = vrot.slane %v169, %v172
  %174 = vset.pattern.permute.xlu0 15
  %175 = vperm.xlu0 %174, %v42
  %v176 = vpop.permute.xlu0 %175
  %178 = vset.pattern.permute.xlu0 15
  %179 = vperm.xlu0 %178, %v43
  %v180 = vpop.permute.xlu0 %179
  %182 = vset.pattern.permute.xlu0 15
  %183 = vperm.xlu0 %182, %v44
  %v184 = vpop.permute.xlu0 %183
  %186 = vset.pattern.permute.xlu0 15
  %187 = vperm.xlu0 %186, %v45
  %v188 = vpop.permute.xlu0 %187
  %v190 = vmul.f32 %v173, %v176
  %v191 = vmul.f32 %v173, %v180
  %v192 = vmul.f32 %v173, %v184
  %v193 = vmul.f32 %v173, %v188
  %v194 = vadd.f32 %v150, %v190
  %v195 = vadd.f32 %v155, %v191
  %v196 = vadd.f32 %v160, %v192
  %v197 = vadd.f32 %v165, %v193
  %v198 = vmax.f32 %v150, 0.0
  %v199 = vmax.f32 %v194, 0.0
  %v200 = vmax.f32 %v155, 0.0
  %v201 = vmax.f32 %v195, 0.0
  %v202 = vmax.f32 %v160, 0.0
  %v203 = vmax.f32 %v196, 0.0
  %v204 = vmax.f32 %v165, 0.0
  %v205 = vmax.f32 %v197, 0.0
  %v206 = vld [vmem:[%s3] sm:$0xff]
  %v207 = vld [vmem:[%s3 + $0x8] sm:$0xff]
  %v208 = vld [vmem:[%s3 + $0x10] sm:$0xff]
  %v209 = vld [vmem:[%s3 + $0x18] sm:$0xff]
  %v210 = vld [vmem:[%s4] sm:$0xff]
  %v211 = vld [vmem:[%s4 + $0x8] sm:$0xff]
  %v212 = vld [vmem:[%s4 + $0x10] sm:$0xff]
  %v213 = vld [vmem:[%s4 + $0x18] sm:$0xff]
  %215 = vset.pattern.permute.xlu0 0
  %216 = vperm.xlu0 %215, %v210
  %v217 = vpop.permute.xlu0 %216
  %220 = vset.pattern.permute.xlu0 0
  %221 = vperm.xlu0 %220, %v211
  %v222 = vpop.permute.xlu0 %221
  %225 = vset.pattern.permute.xlu0 0
  %226 = vperm.xlu0 %225, %v212
  %v227 = vpop.permute.xlu0 %226
  %230 = vset.pattern.permute.xlu0 0
  %231 = vperm.xlu0 %230, %v213
  %v232 = vpop.permute.xlu0 %231
  %vm234 = vcmask 261120
  %v236 = vsel %vm234, %v206, 0
  %v239 = vsel %vm234, %v207, 0
  %v242 = vsel %vm234, %v208, 0
  %v245 = vsel %vm234, %v209, 0
  %247 = vmatprep.subr.mxu0 %v199
  %248 = vmatpush1.msra.mxu0 %v198
  %249 = vmatprep.subr.mxu0 %v201
  %250 = vmatpush1.msra.mxu0 %v200
  %251 = vmatprep.subr.mxu0 %v203
  %252 = vmatpush1.msra.mxu0 %v202
  %253 = vmatprep.subr.mxu0 %v205
  %254 = vmatpush1.msra.mxu0 %v204
  %255 = vmatprep.subr.mxu0 0.0
  %256 = vmatpush1.msra.mxu0 0.0
  %257 = vmatprep.subr.mxu0 0.0
  %258 = vmatpush1.msra.mxu0 0.0
  %259 = vmatprep.subr.mxu0 0.0
  %260 = vmatpush1.msra.mxu0 0.0
  %261 = vmatprep.subr.mxu0 0.0
  %262 = vmatpush1.msra.mxu0 0.0
  %263 = vmatprep.subr.mxu0 0.0
  %264 = vmatpush1.msra.mxu0 0.0
  %265 = vmatprep.subr.mxu0 0.0
  %266 = vmatpush1.msra.mxu0 0.0
  %267 = vmatprep.subr.mxu0 0.0
  %268 = vmatpush1.msra.mxu0 0.0
  %269 = vmatprep.subr.mxu0 0.0
  %270 = vmatpush1.msra.mxu0 0.0
  %271 = vmatprep.subr.mxu0 0.0
  %272 = vmatpush1.msra.mxu0 0.0
  %273 = vmatprep.subr.mxu0 0.0
  %274 = vmatpush1.msra.mxu0 0.0
  %275 = vmatprep.subr.mxu0 0.0
  %276 = vmatpush1.msra.mxu0 0.0
  %277 = vmatprep.subr.mxu0 0.0
  %278 = vmatpush1.msra.mxu0 0.0
  %279 = vmatprep.subr.mxu0 0.0
  %280 = vmatpush1.msra.mxu0 0.0
  %281 = vmatprep.subr.mxu0 0.0
  %282 = vmatpush1.msra.mxu0 0.0
  %283 = vmatprep.subr.mxu0 0.0
  %284 = vmatpush1.msra.mxu0 0.0
  %285 = vmatprep.subr.mxu0 0.0
  %286 = vmatpush1.msra.mxu0 0.0
  %287 = vmatprep.subr.mxu0 0.0
  %288 = vmatpush1.msra.mxu0 0.0
  %289 = vmatprep.subr.mxu0 0.0
  %290 = vmatpush1.msra.mxu0 0.0
  %291 = vmatprep.subr.mxu0 0.0
  %292 = vmatpush1.msra.mxu0 0.0
  %293 = vmatprep.subr.mxu0 0.0
  %294 = vmatpush1.msra.mxu0 0.0
  %295 = vmatprep.subr.mxu0 0.0
  %296 = vmatpush1.msra.mxu0 0.0
  %297 = vmatprep.subr.mxu0 0.0
  %298 = vmatpush1.msra.mxu0 0.0
  %299 = vmatprep.subr.mxu0 0.0
  %300 = vmatpush1.msra.mxu0 0.0
  %301 = vmatprep.subr.mxu0 0.0
  %302 = vmatpush1.msra.mxu0 0.0
  %303 = vmatprep.subr.mxu0 0.0
  %304 = vmatpush1.msra.mxu0 0.0
  %305 = vmatprep.subr.mxu0 0.0
  %306 = vmatpush1.msra.mxu0 0.0
  %307 = vmatprep.subr.mxu0 0.0
  %308 = vmatpush1.msra.mxu0 0.0
  %309 = vmatprep.subr.mxu0 0.0
  %310 = vmatpush1.msra.mxu0 0.0
  %311 = vmatprep.mubr.f32.mxu0 0.0
  %312 = vmatmul.mubr.f32.gmra.mrb[0].mxu0 %v236
  %v313 = vpop.f32.mrb[0].mxu0
  %v314 = vadd.f32 %v217, %v313
  %v315 = vpop.f32.mrb[0].mxu0
  %v316 = vadd.f32 %v217, %v315
  %317 = vmatprep.mubr.f32.mxu0 0.0
  %318 = vmatmul.mubr.f32.gmra.mrb[0].mxu0 %v239
  %v319 = vpop.f32.mrb[0].mxu0
  %v320 = vadd.f32 %v222, %v319
  %v321 = vpop.f32.mrb[0].mxu0
  %v322 = vadd.f32 %v222, %v321
  %323 = vmatprep.mubr.f32.mxu0 0.0
  %324 = vmatmul.mubr.f32.gmra.mrb[0].mxu0 %v242
  %v325 = vpop.f32.mrb[0].mxu0
  %v326 = vadd.f32 %v227, %v325
  %v327 = vpop.f32.mrb[0].mxu0
  %v328 = vadd.f32 %v227, %v327
  %329 = vmatprep.mubr.f32.mxu0 0.0
  %330 = vmatmul.mubr.f32.gmra.mrb[0].mxu0 %v245
  %v331 = vpop.f32.mrb[0].mxu0
  %v332 = vadd.f32 %v232, %v331
  %v333 = vpop.f32.mrb[0].mxu0
  %v334 = vadd.f32 %v232, %v333
  %335 = vdwg.mxu0
  %v336 = vmax.f32 %v314, 0.0
  %v337 = vmax.f32 %v316, 0.0
  %v338 = vmax.f32 %v320, 0.0
  %v339 = vmax.f32 %v322, 0.0
  %v340 = vmax.f32 %v326, 0.0
  %v341 = vmax.f32 %v328, 0.0
  %v342 = vmax.f32 %v332, 0.0
  %v343 = vmax.f32 %v334, 0.0
  %v344 = vld [vmem:[%s5] sm:$0xff]
  %v345 = vld [vmem:[%s5 + $0x8] sm:$0xff]
  %v346 = vld [vmem:[%s6] sm:$0xff]
  %v347 = vld [vmem:[%s6 + $0x8] sm:$0xff]
  %349 = vset.pattern.permute.xlu0 0
  %350 = vperm.xlu0 %349, %v346
  %v351 = vpop.permute.xlu0 %350
  %354 = vset.pattern.permute.xlu0 0
  %355 = vperm.xlu0 %354, %v347
  %v356 = vpop.permute.xlu0 %355
  %v359 = vsel %vm234, %v344, 0
  %v362 = vsel %vm234, %v345, 0
  %364 = vmatprep.subr.mxu0 %v337
  %365 = vmatpush1.msra.mxu0 %v336
  %366 = vmatprep.subr.mxu0 %v339
  %367 = vmatpush1.msra.mxu0 %v338
  %368 = vmatprep.subr.mxu0 %v341
  %369 = vmatpush1.msra.mxu0 %v340
  %370 = vmatprep.subr.mxu0 %v343
  %371 = vmatpush1.msra.mxu0 %v342
  %372 = vmatprep.subr.mxu0 0.0
  %373 = vmatpush1.msra.mxu0 0.0
  %374 = vmatprep.subr.mxu0 0.0
  %375 = vmatpush1.msra.mxu0 0.0
  %376 = vmatprep.subr.mxu0 0.0
  %377 = vmatpush1.msra.mxu0 0.0
  %378 = vmatprep.subr.mxu0 0.0
  %379 = vmatpush1.msra.mxu0 0.0
  %380 = vmatprep.subr.mxu0 0.0
  %381 = vmatpush1.msra.mxu0 0.0
  %382 = vmatprep.subr.mxu0 0.0
  %383 = vmatpush1.msra.mxu0 0.0
  %384 = vmatprep.subr.mxu0 0.0
  %385 = vmatpush1.msra.mxu0 0.0
  %386 = vmatprep.subr.mxu0 0.0
  %387 = vmatpush1.msra.mxu0 0.0
  %388 = vmatprep.subr.mxu0 0.0
  %389 = vmatpush1.msra.mxu0 0.0
  %390 = vmatprep.subr.mxu0 0.0
  %391 = vmatpush1.msra.mxu0 0.0
  %392 = vmatprep.subr.mxu0 0.0
  %393 = vmatpush1.msra.mxu0 0.0
  %394 = vmatprep.subr.mxu0 0.0
  %395 = vmatpush1.msra.mxu0 0.0
  %396 = vmatprep.subr.mxu0 0.0
  %397 = vmatpush1.msra.mxu0 0.0
  %398 = vmatprep.subr.mxu0 0.0
  %399 = vmatpush1.msra.mxu0 0.0
  %400 = vmatprep.subr.mxu0 0.0
  %401 = vmatpush1.msra.mxu0 0.0
  %402 = vmatprep.subr.mxu0 0.0
  %403 = vmatpush1.msra.mxu0 0.0
  %404 = vmatprep.subr.mxu0 0.0
  %405 = vmatpush1.msra.mxu0 0.0
  %406 = vmatprep.subr.mxu0 0.0
  %407 = vmatpush1.msra.mxu0 0.0
  %408 = vmatprep.subr.mxu0 0.0
  %409 = vmatpush1.msra.mxu0 0.0
  %410 = vmatprep.subr.mxu0 0.0
  %411 = vmatpush1.msra.mxu0 0.0
  %412 = vmatprep.subr.mxu0 0.0
  %413 = vmatpush1.msra.mxu0 0.0
  %414 = vmatprep.subr.mxu0 0.0
  %415 = vmatpush1.msra.mxu0 0.0
  %416 = vmatprep.subr.mxu0 0.0
  %417 = vmatpush1.msra.mxu0 0.0
  %418 = vmatprep.subr.mxu0 0.0
  %419 = vmatpush1.msra.mxu0 0.0
  %420 = vmatprep.subr.mxu0 0.0
  %421 = vmatpush1.msra.mxu0 0.0
  %422 = vmatprep.subr.mxu0 0.0
  %423 = vmatpush1.msra.mxu0 0.0
  %424 = vmatprep.subr.mxu0 0.0
  %425 = vmatpush1.msra.mxu0 0.0
  %426 = vmatprep.subr.mxu0 0.0
  %427 = vmatpush1.msra.mxu0 0.0
  %428 = vmatprep.mubr.f32.mxu0 0.0
  %429 = vmatmul.mubr.f32.gmra.mrb[0].mxu0 %v359
  %v430 = vpop.f32.mrb[0].mxu0
  %v431 = vadd.f32 %v351, %v430
  %v432 = vpop.f32.mrb[0].mxu0
  %v433 = vadd.f32 %v351, %v432
  %434 = vmatprep.mubr.f32.mxu0 0.0
  %435 = vmatmul.mubr.f32.gmra.mrb[0].mxu0 %v362
  %v436 = vpop.f32.mrb[0].mxu0
  %v437 = vadd.f32 %v356, %v436
  %v438 = vpop.f32.mrb[0].mxu0
  %v439 = vadd.f32 %v356, %v438
  %440 = vdwg.mxu0
  %v441 = vmax.f32 %v431, 0.0
  %v442 = vmax.f32 %v433, 0.0
  %v443 = vmax.f32 %v437, 0.0
  %v444 = vmax.f32 %v439, 0.0
  %v445 = vld [vmem:[%s7] sm:$0xff]
  %v446 = vld [vmem:[%s8] sm:$0xff]
  %448 = vset.pattern.permute.xlu0 0
  %449 = vperm.xlu0 %448, %v446
  %v450 = vpop.permute.xlu0 %449
  %v453 = vsel %vm70, %v445, 0
  %455 = vmatprep.subr.mxu0 %v442
  %456 = vmatpush1.msra.mxu0 %v441
  %457 = vmatprep.subr.mxu0 %v444
  %458 = vmatpush1.msra.mxu0 %v443
  %459 = vmatprep.subr.mxu0 0.0
  %460 = vmatpush1.msra.mxu0 0.0
  %461 = vmatprep.subr.mxu0 0.0
  %462 = vmatpush1.msra.mxu0 0.0
  %463 = vmatprep.subr.mxu0 0.0
  %464 = vmatpush1.msra.mxu0 0.0
  %465 = vmatprep.subr.mxu0 0.0
  %466 = vmatpush1.msra.mxu0 0.0
  %467 = vmatprep.subr.mxu0 0.0
  %468 = vmatpush1.msra.mxu0 0.0
  %469 = vmatprep.subr.mxu0 0.0
  %470 = vmatpush1.msra.mxu0 0.0
  %471 = vmatprep.subr.mxu0 0.0
  %472 = vmatpush1.msra.mxu0 0.0
  %473 = vmatprep.subr.mxu0 0.0
  %474 = vmatpush1.msra.mxu0 0.0
  %475 = vmatprep.subr.mxu0 0.0
  %476 = vmatpush1.msra.mxu0 0.0
  %477 = vmatprep.subr.mxu0 0.0
  %478 = vmatpush1.msra.mxu0 0.0
  %479 = vmatprep.subr.mxu0 0.0
  %480 = vmatpush1.msra.mxu0 0.0
  %481 = vmatprep.subr.mxu0 0.0
  %482 = vmatpush1.msra.mxu0 0.0
  %483 = vmatprep.subr.mxu0 0.0
  %484 = vmatpush1.msra.mxu0 0.0
  %485 = vmatprep.subr.mxu0 0.0
  %486 = vmatpush1.msra.mxu0 0.0
  %487 = vmatprep.subr.mxu0 0.0
  %488 = vmatpush1.msra.mxu0 0.0
  %489 = vmatprep.subr.mxu0 0.0
  %490 = vmatpush1.msra.mxu0 0.0
  %491 = vmatprep.subr.mxu0 0.0
  %492 = vmatpush1.msra.mxu0 0.0
  %493 = vmatprep.subr.mxu0 0.0
  %494 = vmatpush1.msra.mxu0 0.0
  %495 = vmatprep.subr.mxu0 0.0
  %496 = vmatpush1.msra.mxu0 0.0
  %497 = vmatprep.subr.mxu0 0.0
  %498 = vmatpush1.msra.mxu0 0.0
  %499 = vmatprep.subr.mxu0 0.0
  %500 = vmatpush1.msra.mxu0 0.0
  %501 = vmatprep.subr.mxu0 0.0
  %502 = vmatpush1.msra.mxu0 0.0
  %503 = vmatprep.subr.mxu0 0.0
  %504 = vmatpush1.msra.mxu0 0.0
  %505 = vmatprep.subr.mxu0 0.0
  %506 = vmatpush1.msra.mxu0 0.0
  %507 = vmatprep.subr.mxu0 0.0
  %508 = vmatpush1.msra.mxu0 0.0
  %509 = vmatprep.subr.mxu0 0.0
  %510 = vmatpush1.msra.mxu0 0.0
  %511 = vmatprep.subr.mxu0 0.0
  %512 = vmatpush1.msra.mxu0 0.0
  %513 = vmatprep.subr.mxu0 0.0
  %514 = vmatpush1.msra.mxu0 0.0
  %515 = vmatprep.subr.mxu0 0.0
  %516 = vmatpush1.msra.mxu0 0.0
  %517 = vmatprep.subr.mxu0 0.0
  %518 = vmatpush1.msra.mxu0 0.0
  %519 = vmatprep.mubr.f32.mxu0 0.0
  %520 = vmatmul.mubr.f32.gmra.mrb[0].mxu0 %v453
  %v521 = vpop.f32.mrb[0].mxu0
  %v522 = vadd.f32 %v450, %v521
  %v523 = vpop.f32.mrb[0].mxu0
  %v524 = vadd.f32 %v450, %v523
  %525 = vdwg.mxu0
  %v526 = vmax.f32 %v522, 0.0
  %v527 = vmax.f32 %v524, 0.0
  %v528 = vld [vmem:[%s9] sm:$0xff]
  %530 = vset.pattern.permute.xlu0 0
  %531 = vperm.xlu0 %530, %v528
  %v532 = vpop.permute.xlu0 %531
  %v534 = vmul.f32 %v526, %v532
  %v535 = vmul.f32 %v527, %v532
  %v536 = vrot.slane %v534, 4
  %v537 = vadd.f32 %v534, %v536
  %v538 = vrot.slane %v537, 2
  %v539 = vadd.f32 %v537, %v538
  %v540 = vrot.slane %v539, 1
  %v541 = vadd.f32 %v539, %v540
  %v542 = vrot.slane %v535, 4
  %v543 = vadd.f32 %v535, %v542
  %v544 = vrot.slane %v543, 2
  %v545 = vadd.f32 %v543, %v544
  %v546 = vrot.slane %v545, 1
  %v547 = vadd.f32 %v545, %v546
  %v548 = vld [vmem:[#allocation2] sm:$0x1]
  %550 = vset.pattern.permute.xlu0 0
  %551 = vperm.xlu0 %550, %v548
  %v552 = vpop.permute.xlu0 %551
  %v554 = vlaneseq
  %v555 = vshrl.u32 %v554, 7
  %v556 = vsub.s32 0, %v555
  %v557 = vrot.slane %v552, %v556
  %v558 = vadd.f32 %v541, %v557
  %v559 = vadd.f32 %v547, %v557
  %v560 = vxor.u32 %v558, 2147483648
  %v561 = vmul.f32 %v560, 1.442695
  %v562 = vpow.pop %v561
  %v563 = vadd.f32 %v562, 1.0
  %v564 = vrcp.pop %v563
  %v565 = vmul.f32 1.0, %v564
  %v566 = vxor.u32 %v559, 2147483648
  %v567 = vmul.f32 %v566, 1.442695
  %v568 = vpow.pop %v567
  %v569 = vadd.f32 %v568, 1.0
  %v570 = vrcp.pop %v569
  %v571 = vmul.f32 1.0, %v570
  %v572 = vsub.f32 %v168, 1.0
  %v573 = vsub.f32 %v565, %v571
  %v574 = vmul.f32 %v572, %v573
  %v576 = vrot.slane %v574, 6
  %vm578 = vcmask 1040384
  %v579 = vsel %vm578, %v558, %v576
  %580 = vst [vmem:[%s11] sm:$0x3] %v579
  // Predicated region
  $region46: #{ceum_forward.1} parent=0 // pred_check
    _
  $region47: #{ceum_forward.1} parent=0 // pred_check_branch
    %582 = sbr.rel (0) target = $region49
  $region48: #{ceum_forward.1} parent=0 // pred_region
    _
  $region49: #{ceum_forward.1} parent=0 // pred_fallthru
    _
  // Predicated region
  $region50: #{ceum_forward.1} parent=0 // pred_check
    _
  $region51: #{ceum_forward.1} parent=0 // pred_check_branch
    %584 = sbr.rel (0) target = $region53
  $region52: #{ceum_forward.1} parent=0 // pred_region
    _
  $region53: #{ceum_forward.1} parent=0 // pred_fallthru
    _

</llo_original>
